<compile_context>
chip_gen: v5e
topology: v5e:2x2
jax: 0.10.0
libtpu: 0.0.40
codegen_flags: <defaults>
</compile_context>

<pallas_src>
import functools

import jax
import jax.numpy as jnp
from jax import lax
from jax.experimental import pallas as pl
from jax.experimental.pallas import tpu as pltpu


def _round_up(x, m):
    return (x + m - 1) // m * m


def _pick_tf(f_pad, f_chunk):
    """F-tile width: whole F if small, else the largest of 512/256/128 dividing F_pad."""
    if f_pad <= f_chunk:
        return f_pad
    for cand in (512, 256, 128):
        if f_pad % cand == 0:
            return cand
    return 128  # unreachable: f_pad is a multiple of 128


def _pick_vmem_limit_bytes():
    """Generation-aware VMEM limit: leave headroom on v7x (64 MiB), use more on v5e/v6e."""
    cap = None
    try:
        cap = getattr(pltpu.get_tpu_info(), "vmem_capacity_bytes", None)
    except Exception:
        cap = None
    if not cap:
        return 64 * 1024 * 1024
    return int(max(32 * 1024 * 1024, min(cap - 12 * 1024 * 1024, 100 * 1024 * 1024)))


def _ff_kernel(x_ref, gamma_ref, beta_ref, w1_ref, b1_ref, w2_ref, b2_ref, o_ref,
               xn_ref, acc_ref, *, d_valid):
    """Grid = (row_tiles, f_tiles).  Row axis parallel, F axis is the reduction.

    x_ref:     (tm, D_pad)  input rows (fetched once per row tile; constant over k)
    w1_ref:    (D_pad, tf)  streamed F-tile of w1 (bf16)
    b1_ref:    (1, tf)      streamed F-tile of b1 (f32)
    w2_ref:    (tf, D_pad)  streamed F-tile of w2 (bf16)
    xn_ref:    (tm, D_pad)  bf16 VMEM scratch: LayerNorm output, computed at k == 0
    acc_ref:   (tm, D_pad)  f32 VMEM scratch accumulator over F-tiles
    """
    k = pl.program_id(1)

    @pl.when(k == 0)
    def _():
        # ---- LayerNorm over the valid last-dim (eps = 1e-5, PyTorch default), f32 ----
        x = x_ref[...].astype(jnp.float32)
        tm, d_pad = x.shape
        inv_d = jnp.float32(1.0 / d_valid)
        mean = jnp.sum(x, axis=-1, keepdims=True) * inv_d       # padded cols are zero
        diff = x - mean
        if d_pad != d_valid:
            col_mask = lax.broadcasted_iota(jnp.int32, (tm, d_pad), 1) < d_valid
            diff = jnp.where(col_mask, diff, 0.0)                # mask padded-col stats
        var = jnp.sum(diff * diff, axis=-1, keepdims=True) * inv_d
        xn = diff * lax.rsqrt(var + 1e-5)
        xn = xn * gamma_ref[...] + beta_ref[...]                 # padded gamma/beta = 0
        xn_ref[...] = xn.astype(jnp.bfloat16)                    # bf16 MXU operand
        acc_ref[...] = jnp.zeros_like(acc_ref)

    # ---- one F-tile: h = relu(xn @ w1_tile + b1_tile); acc += h @ w2_tile ----
    h = jnp.dot(xn_ref[...], w1_ref[...], preferred_element_type=jnp.float32)
    h = jnp.maximum(h + b1_ref[...], 0.0)                        # bias/relu in f32 (VPU)
    # dropout1: identity (inference)
    acc_ref[...] += jnp.dot(h.astype(jnp.bfloat16), w2_ref[...],
                            preferred_element_type=jnp.float32)

    @pl.when(k == pl.num_programs(1) - 1)
    def _():
        # dropout2: identity (inference)
        o_ref[...] = (acc_ref[...] + b2_ref[...]).astype(o_ref.dtype)


def prepare_params(gamma, beta, w1, b1, w2, b2):
    """Pad feature dims to multiples of 128 (lane-dense) and cast weights to bf16.

    Hoist this out of the per-step path: call once per model, reuse the result.
    """
    D, F = w1.shape
    assert w2.shape == (F, D)
    D_pad, F_pad = _round_up(D, 128), _round_up(F, 128)
    gamma_p = jnp.zeros((1, D_pad), jnp.float32).at[0, :D].set(gamma.astype(jnp.float32))
    beta_p = jnp.zeros((1, D_pad), jnp.float32).at[0, :D].set(beta.astype(jnp.float32))
    w1_p = jnp.zeros((D_pad, F_pad), jnp.bfloat16).at[:D, :F].set(w1.astype(jnp.bfloat16))
    b1_p = jnp.zeros((1, F_pad), jnp.float32).at[0, :F].set(b1.astype(jnp.float32))
    w2_p = jnp.zeros((F_pad, D_pad), jnp.bfloat16).at[:F, :D].set(w2.astype(jnp.bfloat16))
    b2_p = jnp.zeros((1, D_pad), jnp.float32).at[0, :D].set(b2.astype(jnp.float32))
    return dict(D=D, F=F, gamma=gamma_p, beta=beta_p, w1=w1_p, b1=b1_p, w2=w2_p, b2=b2_p)


def feed_forward_prepared(x, p, *, row_tile=256, f_chunk=512):
    """x: (B, S, D); p: output of prepare_params. Returns (B, S, D)."""
    B, S, D = x.shape
    assert D == p["D"]
    N = B * S
    D_pad = p["gamma"].shape[1]
    F_pad = p["w1"].shape[1]
    tf = _pick_tf(F_pad, f_chunk)

    # Row tile: one tile for small N; otherwise 256 so a v7x megacore gets >= 2 steps/TC.
    if N <= 512:
        tm = _round_up(N, 16)
    else:
        tm = row_tile
    N_pad = _round_up(N, tm)

    x2d = x.reshape(N, D)
    needs_pad = (N_pad != N) or (D_pad != D)
    if needs_pad:
        x2d = jnp.zeros((N_pad, D_pad), x.dtype).at[:N, :D].set(x2d)

    kernel = functools.partial(_ff_kernel, d_valid=D)

    out = pl.pallas_call(
        kernel,
        out_shape=jax.ShapeDtypeStruct((N_pad, D_pad), x.dtype),
        grid=(N_pad // tm, F_pad // tf),
        in_specs=[
            pl.BlockSpec((tm, D_pad), lambda i, k: (i, 0)),     # x row tile
            pl.BlockSpec((1, D_pad), lambda i, k: (0, 0)),      # gamma
            pl.BlockSpec((1, D_pad), lambda i, k: (0, 0)),      # beta
            pl.BlockSpec((D_pad, tf), lambda i, k: (0, k)),     # w1 F-tile (streamed)
            pl.BlockSpec((1, tf), lambda i, k: (0, k)),         # b1 F-tile (streamed)
            pl.BlockSpec((tf, D_pad), lambda i, k: (k, 0)),     # w2 F-tile (streamed)
            pl.BlockSpec((1, D_pad), lambda i, k: (0, 0)),      # b2
        ],
        out_specs=pl.BlockSpec((tm, D_pad), lambda i, k: (i, 0)),
        scratch_shapes=[
            pltpu.VMEM((tm, D_pad), jnp.bfloat16),              # xn (LayerNorm output)
            pltpu.VMEM((tm, D_pad), jnp.float32),               # accumulator over F
        ],
        compiler_params=pltpu.CompilerParams(
            dimension_semantics=("parallel", "arbitrary"),
            vmem_limit_bytes=_pick_vmem_limit_bytes(),
        ),
    )(x2d, p["gamma"], p["beta"], p["w1"], p["b1"], p["w2"], p["b2"])

    if needs_pad:
        out = out[:N, :D]
    return out.reshape(B, S, D)


def feed_forward(x, gamma, beta, w1, b1, w2, b2, *, row_tile=256, f_chunk=512):
    """x: (B, S, D). w1: (D, F), w2: (F, D) (transposed vs. PyTorch)."""
    return feed_forward_prepared(x, prepare_params(gamma, beta, w1, b1, w2, b2),
                                 row_tile=row_tile, f_chunk=f_chunk)


def reference(x, gamma, beta, w1, b1, w2, b2):
    xf = x.astype(jnp.float32)
    mean = jnp.mean(xf, axis=-1, keepdims=True)
    var = jnp.mean((xf - mean) ** 2, axis=-1, keepdims=True)
    xn = (xf - mean) / jnp.sqrt(var + 1e-5) * gamma + beta
    h = jnp.maximum(xn @ w1 + b1, 0.0)
    return (h @ w2 + b2).astype(x.dtype)


def _make_params(key, D, FF):
    kw1, kb1, kw2, kb2 = jax.random.split(key, 4)
    # PyTorch nn.Linear stores (out, in); we keep the (in, out) transpose for matmul.
    w1 = jax.random.normal(kw1, (D, FF), dtype=jnp.float32) * 0.05
    b1 = jax.random.normal(kb1, (FF,), dtype=jnp.float32) * 0.01
    w2 = jax.random.normal(kw2, (FF, D), dtype=jnp.float32) * 0.05
    b2 = jax.random.normal(kb2, (D,), dtype=jnp.float32) * 0.01
    gamma = jnp.ones((D,), dtype=jnp.float32)
    beta = jnp.zeros((D,), dtype=jnp.float32)
    return gamma, beta, w1, b1, w2, b2


if __name__ == "__main__":
    key = jax.random.PRNGKey(0)
    k1, k2, k3, k4 = jax.random.split(key, 4)

    # bf16 MXU operands (f32 accumulation) -> compare against the f32 reference with a
    # correspondingly looser tolerance.
    ATOL = RTOL = 3e-2

    # Check 1: small shapes consistent with the module (input_dim=32, ff_dim=64, B=2, S=8).
    B, S, D, FF = 2, 8, 32, 64
    x = jax.random.normal(k1, (B, S, D), dtype=jnp.float32)
    params = _make_params(k2, D, FF)
    prepared = prepare_params(*params)          # hoisted: pad/cast weights once
    out = feed_forward_prepared(x, prepared)
    jax.block_until_ready(out)
    ref = reference(x, *params)
    assert out.shape == (B, S, D)
    assert jnp.allclose(out, ref, atol=ATOL, rtol=RTOL), (
        f"mismatch vs reference (check 1), max|err|={jnp.max(jnp.abs(out - ref))}")

    # Check 2: multi row-tile path (row padding) + multi F-tile accumulation path.
    B2, S2, D2, FF2 = 2, 300, 32, 1024
    x2 = jax.random.normal(k3, (B2, S2, D2), dtype=jnp.float32)
    params2 = _make_params(k4, D2, FF2)
    prepared2 = prepare_params(*params2)
    out2 = feed_forward_prepared(x2, prepared2)
    jax.block_until_ready(out2)
    ref2 = reference(x2, *params2)
    assert out2.shape == (B2, S2, D2)
    assert jnp.allclose(out2, ref2, atol=ATOL, rtol=RTOL), (
        f"mismatch vs reference (check 2), max|err|={jnp.max(jnp.abs(out2 - ref2))}")

    print("KERNEL_OK")
</pallas_src>

<mosaic_0001>
module attributes {stable_mosaic.version = 11 : i64} {
  func.func @_ff_kernel(%arg0: i32, %arg1: i32, %arg2: memref<16x128xf32, #tpu.memory_space<vmem>>, %arg3: memref<1x128xf32, #tpu.memory_space<vmem>>, %arg4: memref<1x128xf32, #tpu.memory_space<vmem>>, %arg5: memref<128x128xbf16, #tpu.memory_space<vmem>>, %arg6: memref<1x128xf32, #tpu.memory_space<vmem>>, %arg7: memref<128x128xbf16, #tpu.memory_space<vmem>>, %arg8: memref<1x128xf32, #tpu.memory_space<vmem>>, %arg9: memref<16x128xf32, #tpu.memory_space<vmem>>, %arg10: memref<16x128xbf16, #tpu.memory_space<vmem>>, %arg11: memref<16x128xf32, #tpu.memory_space<vmem>>) attributes {dimension_semantics = [#tpu.dimension_semantics<parallel>, #tpu.dimension_semantics<arbitrary>], iteration_bounds = array<i64: 1, 1>, scalar_prefetch = 0 : i64, scratch_operands = 2 : i64, tpu.core_type = #tpu.core_type<tc>, window_params = [{transform_indices = @transform_0, window_bounds = array<i64: 16, 128>}, {pipeline_mode = #tpu.pipeline_mode<synchronous>, transform_indices = @transform_1, window_bounds = array<i64: 1, 128>}, {pipeline_mode = #tpu.pipeline_mode<synchronous>, transform_indices = @transform_2, window_bounds = array<i64: 1, 128>}, {transform_indices = @transform_3, window_bounds = array<i64: 128, 128>}, {transform_indices = @transform_4, window_bounds = array<i64: 1, 128>}, {transform_indices = @transform_5, window_bounds = array<i64: 128, 128>}, {pipeline_mode = #tpu.pipeline_mode<synchronous>, transform_indices = @transform_6, window_bounds = array<i64: 1, 128>}, {transform_indices = @transform_7, window_bounds = array<i64: 16, 128>}]} {
    %c0_i32 = arith.constant 0 : i32
    %0 = arith.cmpi eq, %arg1, %c0_i32 : i32
    %1 = arith.extui %0 : i1 to i32
    %c0_i32_0 = arith.constant 0 : i32
    %2 = arith.cmpi ne, %1, %c0_i32_0 : i32
    scf.if %2 {
      %c0_16 = arith.constant 0 : index
      %c0_17 = arith.constant 0 : index
      %20 = vector.load %arg2[%c0_16, %c0_17] : memref<16x128xf32, #tpu.memory_space<vmem>>, vector<16x128xf32>
      %cst_18 = arith.constant dense<0.000000e+00> : vector<16xf32>
      %21 = vector.multi_reduction <add>, %20, %cst_18 [1] : vector<16x128xf32> to vector<16xf32>
      %22 = vector.shape_cast %21 : vector<16xf32> to vector<16x1xf32>
      %cst_19 = arith.constant 3.125000e-02 : f32
      %23 = vector.broadcast %cst_19 : f32 to vector<16x1xf32>
      %24 = arith.mulf %22, %23 : vector<16x1xf32>
      %25 = vector.broadcast %24 : vector<16x1xf32> to vector<16x128xf32>
      %26 = arith.subf %20, %25 : vector<16x128xf32>
      %27 = tpu.iota {dimensions = array<i32: 1>} : vector<16x128xi32>
      %c32_i32 = arith.constant 32 : i32
      %28 = vector.broadcast %c32_i32 : i32 to vector<16x128xi32>
      %29 = arith.cmpi slt, %27, %28 : vector<16x128xi32>
      %cst_20 = arith.constant 0.000000e+00 : f32
      %30 = vector.broadcast %cst_20 : f32 to vector<16x128xf32>
      %31 = arith.select %29, %26, %30 : vector<16x128xi1>, vector<16x128xf32>
      %32 = arith.mulf %31, %31 : vector<16x128xf32>
      %cst_21 = arith.constant dense<0.000000e+00> : vector<16xf32>
      %33 = vector.multi_reduction <add>, %32, %cst_21 [1] : vector<16x128xf32> to vector<16xf32>
      %34 = vector.shape_cast %33 : vector<16xf32> to vector<16x1xf32>
      %cst_22 = arith.constant 3.125000e-02 : f32
      %35 = vector.broadcast %cst_22 : f32 to vector<16x1xf32>
      %36 = arith.mulf %34, %35 : vector<16x1xf32>
      %cst_23 = arith.constant 9.99999974E-6 : f32
      %37 = vector.broadcast %cst_23 : f32 to vector<16x1xf32>
      %38 = arith.addf %36, %37 : vector<16x1xf32>
      %39 = math.rsqrt %38 : vector<16x1xf32>
      %40 = vector.broadcast %39 : vector<16x1xf32> to vector<16x128xf32>
      %41 = arith.mulf %31, %40 : vector<16x128xf32>
      %c0_24 = arith.constant 0 : index
      %c0_25 = arith.constant 0 : index
      %42 = vector.load %arg3[%c0_24, %c0_25] : memref<1x128xf32, #tpu.memory_space<vmem>>, vector<1x128xf32>
      %43 = vector.broadcast %42 : vector<1x128xf32> to vector<16x128xf32>
      %44 = arith.mulf %41, %43 : vector<16x128xf32>
      %c0_26 = arith.constant 0 : index
      %c0_27 = arith.constant 0 : index
      %45 = vector.load %arg4[%c0_26, %c0_27] : memref<1x128xf32, #tpu.memory_space<vmem>>, vector<1x128xf32>
      %46 = vector.broadcast %45 : vector<1x128xf32> to vector<16x128xf32>
      %47 = arith.addf %44, %46 : vector<16x128xf32>
      %48 = arith.truncf %47 : vector<16x128xf32> to vector<16x128xbf16>
      %c0_28 = arith.constant 0 : index
      %c0_29 = arith.constant 0 : index
      %49 = vector.load %arg10[%c0_28, %c0_29] : memref<16x128xbf16, #tpu.memory_space<vmem>>, vector<16x128xbf16>
      tpu.vector_store %arg10[%c0_28, %c0_29], %48 {strides = array<i32>} : memref<16x128xbf16, #tpu.memory_space<vmem>>, vector<16x128xbf16>,
      %cst_30 = arith.constant 0.000000e+00 : f32
      %50 = vector.broadcast %cst_30 : f32 to vector<16x128xf32>
      %c0_31 = arith.constant 0 : index
      %c0_32 = arith.constant 0 : index
      %51 = vector.load %arg11[%c0_31, %c0_32] : memref<16x128xf32, #tpu.memory_space<vmem>>, vector<16x128xf32>
      tpu.vector_store %arg11[%c0_31, %c0_32], %50 {strides = array<i32>} : memref<16x128xf32, #tpu.memory_space<vmem>>, vector<16x128xf32>,
    } else {
    }
    %c0 = arith.constant 0 : index
    %c0_1 = arith.constant 0 : index
    %3 = vector.load %arg10[%c0, %c0_1] : memref<16x128xbf16, #tpu.memory_space<vmem>>, vector<16x128xbf16>
    %c0_2 = arith.constant 0 : index
    %c0_3 = arith.constant 0 : index
    %4 = vector.load %arg5[%c0_2, %c0_3] : memref<128x128xbf16, #tpu.memory_space<vmem>>, vector<128x128xbf16>
    %cst = arith.constant dense<0.000000e+00> : vector<16x128xf32>
    %5 = tpu.matmul %3, %4, %cst {dimension_numbers = #tpu.dot_dimension_numbers<[1], [0], [0], [1], [0, 0, 1, 1], [], []>} : vector<16x128xbf16>, vector<128x128xbf16>, vector<16x128xf32> -> vector<16x128xf32>
    %c0_4 = arith.constant 0 : index
    %c0_5 = arith.constant 0 : index
    %6 = vector.load %arg6[%c0_4, %c0_5] : memref<1x128xf32, #tpu.memory_space<vmem>>, vector<1x128xf32>
    %7 = vector.broadcast %6 : vector<1x128xf32> to vector<16x128xf32>
    %8 = arith.addf %5, %7 : vector<16x128xf32>
    %cst_6 = arith.constant 0.000000e+00 : f32
    %9 = vector.broadcast %cst_6 : f32 to vector<16x128xf32>
    %10 = arith.maximumf %8, %9 : vector<16x128xf32>
    %c0_7 = arith.constant 0 : index
    %c0_8 = arith.constant 0 : index
    %11 = vector.load %arg11[%c0_7, %c0_8] : memref<16x128xf32, #tpu.memory_space<vmem>>, vector<16x128xf32>
    %12 = arith.truncf %10 : vector<16x128xf32> to vector<16x128xbf16>
    %c0_9 = arith.constant 0 : index
    %c0_10 = arith.constant 0 : index
    %13 = vector.load %arg7[%c0_9, %c0_10] : memref<128x128xbf16, #tpu.memory_space<vmem>>, vector<128x128xbf16>
    %cst_11 = arith.constant dense<0.000000e+00> : vector<16x128xf32>
    %14 = tpu.matmul %12, %13, %cst_11 {dimension_numbers = #tpu.dot_dimension_numbers<[1], [0], [0], [1], [0, 0, 1, 1], [], []>} : vector<16x128xbf16>, vector<128x128xbf16>, vector<16x128xf32> -> vector<16x128xf32>
    %15 = arith.addf %11, %14 : vector<16x128xf32>
    %c0_12 = arith.constant 0 : index
    %c0_13 = arith.constant 0 : index
    %16 = vector.load %arg11[%c0_12, %c0_13] : memref<16x128xf32, #tpu.memory_space<vmem>>, vector<16x128xf32>
    tpu.vector_store %arg11[%c0_12, %c0_13], %15 {strides = array<i32>} : memref<16x128xf32, #tpu.memory_space<vmem>>, vector<16x128xf32>,
    %c0_i32_14 = arith.constant 0 : i32
    %17 = arith.cmpi eq, %arg1, %c0_i32_14 : i32
    %18 = arith.extui %17 : i1 to i32
    %c0_i32_15 = arith.constant 0 : i32
    %19 = arith.cmpi ne, %18, %c0_i32_15 : i32
    scf.if %19 {
      %c0_16 = arith.constant 0 : index
      %c0_17 = arith.constant 0 : index
      %20 = vector.load %arg11[%c0_16, %c0_17] : memref<16x128xf32, #tpu.memory_space<vmem>>, vector<16x128xf32>
      %c0_18 = arith.constant 0 : index
      %c0_19 = arith.constant 0 : index
      %21 = vector.load %arg8[%c0_18, %c0_19] : memref<1x128xf32, #tpu.memory_space<vmem>>, vector<1x128xf32>
      %22 = vector.broadcast %21 : vector<1x128xf32> to vector<16x128xf32>
      %23 = arith.addf %20, %22 : vector<16x128xf32>
      %c0_20 = arith.constant 0 : index
      %c0_21 = arith.constant 0 : index
      %24 = vector.load %arg9[%c0_20, %c0_21] : memref<16x128xf32, #tpu.memory_space<vmem>>, vector<16x128xf32>
      tpu.vector_store %arg9[%c0_20, %c0_21], %23 {strides = array<i32>} : memref<16x128xf32, #tpu.memory_space<vmem>>, vector<16x128xf32>,
    } else {
    }
    return
  }
  func.func @transform_0(%arg0: i32, %arg1: i32) -> (i32, i32) {
    %c0_i32 = arith.constant 0 : i32
    %c0_i32_0 = arith.constant 0 : i32
    return %arg0, %c0_i32 : i32, i32
  }
  func.func @transform_1(%arg0: i32, %arg1: i32) -> (i32, i32) {
    %c0_i32 = arith.constant 0 : i32
    %c0_i32_0 = arith.constant 0 : i32
    %c0_i32_1 = arith.constant 0 : i32
    return %c0_i32, %c0_i32_0 : i32, i32
  }
  func.func @transform_2(%arg0: i32, %arg1: i32) -> (i32, i32) {
    %c0_i32 = arith.constant 0 : i32
    %c0_i32_0 = arith.constant 0 : i32
    %c0_i32_1 = arith.constant 0 : i32
    return %c0_i32, %c0_i32_0 : i32, i32
  }
  func.func @transform_3(%arg0: i32, %arg1: i32) -> (i32, i32) {
    %c0_i32 = arith.constant 0 : i32
    %c0_i32_0 = arith.constant 0 : i32
    return %c0_i32, %arg1 : i32, i32
  }
  func.func @transform_4(%arg0: i32, %arg1: i32) -> (i32, i32) {
    %c0_i32 = arith.constant 0 : i32
    %c0_i32_0 = arith.constant 0 : i32
    return %c0_i32, %arg1 : i32, i32
  }
  func.func @transform_5(%arg0: i32, %arg1: i32) -> (i32, i32) {
    %c0_i32 = arith.constant 0 : i32
    %c0_i32_0 = arith.constant 0 : i32
    return %arg1, %c0_i32 : i32, i32
  }
  func.func @transform_6(%arg0: i32, %arg1: i32) -> (i32, i32) {
    %c0_i32 = arith.constant 0 : i32
    %c0_i32_0 = arith.constant 0 : i32
    %c0_i32_1 = arith.constant 0 : i32
    return %c0_i32, %c0_i32_0 : i32, i32
  }
  func.func @transform_7(%arg0: i32, %arg1: i32) -> (i32, i32) {
    %c0_i32 = arith.constant 0 : i32
    %c0_i32_0 = arith.constant 0 : i32
    return %arg0, %c0_i32 : i32, i32
  }
}

</mosaic_0001>

<llo_original>
// kernel: tpu_custom_call.1
$region0: #{tpu_custom_call.1}
  #allocation0 [shape = 'u32[]', space=smem, size = 0x4, offset = 0x4, fixed_abs, tag = 'smem constant byte address 0x4 - core index']
  #allocation1 [shape = 'u32[72,128]{1,0:T(1,128)}', space=vmem, size = 0x9000, scoped, tag = 'internal scratch']
  #allocation2 [shape = 'bf16[16,128]{1,0:T(8,128)(2,1)}', space=vmem, size = 0x1000, scoped, tag = 'scratch operand']
  #allocation3 [shape = 'f32[16,128]{1,0:T(8,128)}', space=vmem, size = 0x2000, scoped, tag = 'scratch operand']
  %s0 = inlined_call_operand.hbm [shape: f32[16,128], index: 0, kind: input, shape index: {}]
  %s1 = inlined_call_operand.hbm [shape: f32[1,128], index: 1, kind: input, shape index: {}]
  %s2 = inlined_call_operand.vmem [shape: f32[1,128], index: 2, kind: input, shape index: {}]
  %s3 = inlined_call_operand.hbm [shape: bf16[128,128], index: 3, kind: input, shape index: {}]
  %s4 = inlined_call_operand.vmem [shape: f32[1,128], index: 4, kind: input, shape index: {}]
  %s5 = inlined_call_operand.hbm [shape: bf16[128,128], index: 5, kind: input, shape index: {}]
  %s6 = inlined_call_operand.vmem [shape: f32[1,128], index: 6, kind: input, shape index: {}]
  %s7 = inlined_call_operand.hbm [shape: f32[16,128], index: 7, kind: output, shape index: {}]
  %s8 = sld [smem:[#allocation0]]
  $region62: #{tpu_custom_call.1} parent=0
    _
  %s10 = ssub.s32 1, %s8
  %s11 = scalar_select 0, %s10, %s8
  $region1: #{tpu_custom_call.1} parent=0
    #allocation4 [shape = 'u8[8192]{0}', space=vmem, size = 0x2000, scoped, tag = 'input window, operand 0, single buffered']
    #allocation5 [shape = 's32[1]{0}', space=sflag, size = 0x4, scoped, tag = 'scoped memory for tpu_custom_call.1']
    #allocation6 [shape = 's32[1]{0}', space=sflag, size = 0x4, scoped, tag = 'scoped memory for tpu_custom_call.1']
    #allocation7 [shape = 'u8[512]{0}', space=vmem, size = 0x400, scoped, tag = 'input window, operand 1, single buffered']
    #allocation8 [shape = 's32[1]{0}', space=sflag, size = 0x4, scoped, tag = 'scoped memory for tpu_custom_call.1']
    #allocation9 [shape = 'u8[32768]{0}', space=vmem, size = 0x8000, scoped, tag = 'input window, operand 3, single buffered']
    #allocation10 [shape = 'u8[32768]{0}', space=vmem, size = 0x8000, scoped, tag = 'input window, operand 5, single buffered']
    #allocation11 [shape = 's32[1]{0}', space=sflag, size = 0x4, scoped, tag = 'scoped memory for tpu_custom_call.1']
    #allocation12 [shape = 'u8[8192]{0}', space=vmem, size = 0x2000, scoped, tag = 'output window, operand 0, single buffered']
    %12 = vsyncpa [#allocation5], 0
    %13 = vsyncpa [#allocation8], 0
    %14 = vsyncpa [#allocation11], 0
    %15 = vsyncpa [#allocation6], 0
    // Predicated region
    $region2: #{tpu_custom_call.1} parent=1 // pred_check
      _
    $region3: #{tpu_custom_call.1} parent=1 // pred_check_branch
      %17 = sbr.rel (0) target = $region5
    $region4: #{tpu_custom_call.1} parent=1 // pred_region
      %19 = vsyncadd [#allocation5], 0
      %s20 = sshll.u32 %s0, 4
      %s21 = int_to_ptr.hbm [resolvable:$true] %s20
      %s22 = sshll.u32 [#allocation4], 4
      %s23 = int_to_ptr.vmem [resolvable:$true] %s22
      %28 = dma.hbm_to_vmem [thread:$0]  %s21, 256, %s23, [#allocation5], 128, 128, 8
    $region5: #{tpu_custom_call.1} parent=1 // pred_fallthru
      _
    // Predicated region
    $region6: #{tpu_custom_call.1} parent=1 // pred_check
      _
    $region7: #{tpu_custom_call.1} parent=1 // pred_check_branch
      %30 = sbr.rel (0) target = $region9
    $region8: #{tpu_custom_call.1} parent=1 // pred_region
      %32 = vsyncadd [#allocation8], 0
      %s34 = sshll.u32 %s1, 4
      %s35 = int_to_ptr.hbm [resolvable:$true] %s34
      %s36 = sshll.u32 [#allocation7], 4
      %s37 = int_to_ptr.vmem [resolvable:$true] %s36
      %39 = dma.hbm_to_vmem [thread:$0]  %s35, 16, %s37, [#allocation8]
    $region9: #{tpu_custom_call.1} parent=1 // pred_fallthru
      _
    // Predicated region
    $region10: #{tpu_custom_call.1} parent=1 // pred_check
      _
    $region11: #{tpu_custom_call.1} parent=1 // pred_check_branch
      %41 = sbr.rel (0) target = $region13
    $region12: #{tpu_custom_call.1} parent=1 // pred_region
      _
    $region13: #{tpu_custom_call.1} parent=1 // pred_fallthru
      _
    // Predicated region
    $region14: #{tpu_custom_call.1} parent=1 // pred_check
      _
    $region15: #{tpu_custom_call.1} parent=1 // pred_check_branch
      %43 = sbr.rel (0) target = $region17
    $region16: #{tpu_custom_call.1} parent=1 // pred_region
      %45 = vsyncadd [#allocation8], 0
      %s46 = sshll.u32 %s3, 4
      %s47 = int_to_ptr.hbm [resolvable:$true] %s46
      %s48 = sshll.u32 [#allocation9], 4
      %s49 = int_to_ptr.vmem [resolvable:$true] %s48
      %54 = dma.hbm_to_vmem [thread:$0]  %s47, 1024, %s49, [#allocation8], 64, 64, 4
    $region17: #{tpu_custom_call.1} parent=1 // pred_fallthru
      _
    // Predicated region
    $region18: #{tpu_custom_call.1} parent=1 // pred_check
      _
    $region19: #{tpu_custom_call.1} parent=1 // pred_check_branch
      %56 = sbr.rel (0) target = $region21
    $region20: #{tpu_custom_call.1} parent=1 // pred_region
      _
    $region21: #{tpu_custom_call.1} parent=1 // pred_fallthru
      _
    // Predicated region
    $region22: #{tpu_custom_call.1} parent=1 // pred_check
      _
    $region23: #{tpu_custom_call.1} parent=1 // pred_check_branch
      %58 = sbr.rel (0) target = $region25
    $region24: #{tpu_custom_call.1} parent=1 // pred_region
      %60 = vsyncadd [#allocation11], 0
      %s61 = sshll.u32 %s5, 4
      %s62 = int_to_ptr.hbm [resolvable:$true] %s61
      %s63 = sshll.u32 [#allocation10], 4
      %s64 = int_to_ptr.vmem [resolvable:$true] %s63
      %69 = dma.hbm_to_vmem [thread:$0]  %s62, 1024, %s64, [#allocation11], 64, 64, 4
    $region25: #{tpu_custom_call.1} parent=1 // pred_fallthru
      _
    // Predicated region
    $region26: #{tpu_custom_call.1} parent=1 // pred_check
      _
    $region27: #{tpu_custom_call.1} parent=1 // pred_check_branch
      %71 = sbr.rel (0) target = $region29
    $region28: #{tpu_custom_call.1} parent=1 // pred_region
      _
    $region29: #{tpu_custom_call.1} parent=1 // pred_fallthru
      _
    // Predicated region
    $region30: #{tpu_custom_call.1} parent=1 // pred_check
      _
    $region31: #{tpu_custom_call.1} parent=1 // pred_check_branch
      %73 = sbr.rel (0) target = $region33
    $region32: #{tpu_custom_call.1} parent=1 // pred_region
      %75 = dma.done [#allocation5], 256
    $region33: #{tpu_custom_call.1} parent=1 // pred_fallthru
      _
    // Predicated region
    $region34: #{tpu_custom_call.1} parent=1 // pred_check
      _
    $region35: #{tpu_custom_call.1} parent=1 // pred_check_branch
      %77 = sbr.rel (0) target = $region37
    $region36: #{tpu_custom_call.1} parent=1 // pred_region
      %79 = dma.done [#allocation8], 16
    $region37: #{tpu_custom_call.1} parent=1 // pred_fallthru
      _
    // Predicated region
    $region38: #{tpu_custom_call.1} parent=1 // pred_check
      _
    $region39: #{tpu_custom_call.1} parent=1 // pred_check_branch
      %81 = sbr.rel (0) target = $region41
    $region40: #{tpu_custom_call.1} parent=1 // pred_region
      %83 = dma.done [#allocation8], 1024
    $region41: #{tpu_custom_call.1} parent=1 // pred_fallthru
      _
    // Predicated region
    $region42: #{tpu_custom_call.1} parent=1 // pred_check
      _
    $region43: #{tpu_custom_call.1} parent=1 // pred_check_branch
      %85 = sbr.rel (0) target = $region45
    $region44: #{tpu_custom_call.1} parent=1 // pred_region
      %87 = dma.done [#allocation11], 1024
    $region45: #{tpu_custom_call.1} parent=1 // pred_fallthru
      _
    %p88 = scmp.eq.s32.totalorder 0, 0
    // Predicated region
    $region46: #{tpu_custom_call.1} parent=1 // pred_check
      %p89 = pneg %p88
    $region47: #{tpu_custom_call.1} parent=1 // pred_check_branch
      %91 = sbr.rel (%p89) target = $region49
    $region48: #{tpu_custom_call.1} parent=1 // pred_region
      %v92 = vld [vmem:[#allocation4] sm:$0xff]
      %v93 = vld [vmem:[#allocation4 + $0x8] sm:$0xff]
      %94 = vadd.xlane.f32.xlu0 %v92
      %v95 = vpop.xlane.xlu0 %94
      %96 = vadd.xlane.f32.xlu0 %v93
      %v97 = vpop.xlane.xlu0 %96
      %v98 = vmul.f32 %v95, 0.03125
      %v99 = vmul.f32 %v97, 0.03125
      %v100 = vsub.f32 %v92, %v98
      %v101 = vsub.f32 %v93, %v99
      %v102 = vlaneseq
      %v103 = vand.u32 %v102, 127
      %vm104 = vcmp.lt.s32.totalorder %v103, 32
      %v105 = vsel %vm104, %v100, 0.0
      %v106 = vsel %vm104, %v101, 0.0
      %v107 = vmul.f32 %v105, %v105
      %v108 = vmul.f32 %v106, %v106
      %109 = vadd.xlane.f32.xlu0 %v107
      %v110 = vpop.xlane.xlu0 %109
      %111 = vadd.xlane.f32.xlu0 %v108
      %v112 = vpop.xlane.xlu0 %111
      %v113 = vmul.f32 %v110, 0.03125
      %v114 = vmul.f32 %v112, 0.03125
      %v115 = vadd.f32 %v113, 1e-05
      %v116 = vadd.f32 %v114, 1e-05
      %v117 = vrsqrt.pop %v115
      %v118 = vmul.f32 %v117, %v115
      %v119 = vmul.f32 %v118, %v117
      %v120 = vmul.f32 0.5, %v119
      %v121 = vsub.f32 1.5, %v120
      %v122 = vmul.f32 %v117, %v121
      %vm123 = vweird.f32 %v115
      %vm124 = vweird.f32 %v117
      %vm125 = vmor %vm123, %vm124
      %v126 = vsel %vm125, %v117, %v122
      %v127 = vrsqrt.pop %v116
      %v128 = vmul.f32 %v127, %v116
      %v129 = vmul.f32 %v128, %v127
      %v130 = vmul.f32 0.5, %v129
      %v131 = vsub.f32 1.5, %v130
      %v132 = vmul.f32 %v127, %v131
      %vm133 = vweird.f32 %v116
      %vm134 = vweird.f32 %v127
      %vm135 = vmor %vm133, %vm134
      %v136 = vsel %vm135, %v127, %v132
      %v137 = vmul.f32 %v105, %v126
      %v138 = vmul.f32 %v106, %v136
      %v139 = vld [vmem:[#allocation7] sm:$0x1]
      %v141 = vperm.slane %v139, 0
      %v143 = vmul.f32 %v137, %v141
      %v144 = vmul.f32 %v138, %v141
      %v145 = vld [vmem:[%s2] sm:$0x1]
      %v147 = vperm.slane %v145, 0
      %v149 = vadd.f32 %v143, %v147
      %v150 = vadd.f32 %v144, %v147
      %v151 = vpack.c.bf16 %v149, %v149
      %v152 = vpack.c.bf16 %v150, %v150
      %153 = vst [vmem:[#allocation2] sm:$0xf] %v151
      %154 = vst [vmem:[#allocation2 + $0x4] sm:$0xf] %v152
      %155 = vst [vmem:[#allocation3] sm:$0xff] 0.0
      %156 = vst [vmem:[#allocation3 + $0x8] sm:$0xff] 0.0
    $region49: #{tpu_custom_call.1} parent=1 // pred_fallthru
      _
    %v157 = vld [vmem:[#allocation2] sm:$0xf]
    %v158 = vld [vmem:[#allocation2 + $0x4] sm:$0xf]
    %v159 = vld [vmem:[#allocation9] sm:$0xf]
    %v160 = vld [vmem:[#allocation9 + $0x4] sm:$0xf]
    %v161 = vld [vmem:[#allocation9 + $0x8] sm:$0xf]
    %v162 = vld [vmem:[#allocation9 + $0xc] sm:$0xf]
    %v163 = vld [vmem:[#allocation9 + $0x10] sm:$0xf]
    %v164 = vld [vmem:[#allocation9 + $0x14] sm:$0xf]
    %v165 = vld [vmem:[#allocation9 + $0x18] sm:$0xf]
    %v166 = vld [vmem:[#allocation9 + $0x1c] sm:$0xf]
    %v167 = vld [vmem:[#allocation9 + $0x20] sm:$0xf]
    %v168 = vld [vmem:[#allocation9 + $0x24] sm:$0xf]
    %v169 = vld [vmem:[#allocation9 + $0x28] sm:$0xf]
    %v170 = vld [vmem:[#allocation9 + $0x2c] sm:$0xf]
    %v171 = vld [vmem:[#allocation9 + $0x30] sm:$0xf]
    %v172 = vld [vmem:[#allocation9 + $0x34] sm:$0xf]
    %v173 = vld [vmem:[#allocation9 + $0x38] sm:$0xf]
    %v174 = vld [vmem:[#allocation9 + $0x3c] sm:$0xf]
    %v175 = vld [vmem:[%s4] sm:$0x1]
    %v177 = vperm.slane %v175, 0
    %v181 = vunpack.c.l.b16 %v157
    %v182 = vunpack.c.l.b16 %v158
    %v183 = vpack.c.b16 %v182, %v181
    %v201 = vunpack.c.l.b16 %v159
    %v202 = vunpack.c.l.b16 %v160
    %v203 = vunpack.c.l.b16 %v161
    %v204 = vunpack.c.l.b16 %v162
    %v205 = vunpack.c.l.b16 %v163
    %v206 = vunpack.c.l.b16 %v164
    %v207 = vunpack.c.l.b16 %v165
    %v208 = vunpack.c.l.b16 %v166
    %v209 = vunpack.c.l.b16 %v167
    %v210 = vunpack.c.l.b16 %v168
    %v211 = vunpack.c.l.b16 %v169
    %v212 = vunpack.c.l.b16 %v170
    %v213 = vunpack.c.l.b16 %v171
    %v214 = vunpack.c.l.b16 %v172
    %v215 = vunpack.c.l.b16 %v173
    %v216 = vunpack.c.l.b16 %v174
    %v217 = vpack.c.b16 %v202, %v201
    %v218 = vpack.c.b16 %v204, %v203
    %v219 = vpack.c.b16 %v206, %v205
    %v220 = vpack.c.b16 %v208, %v207
    %v221 = vpack.c.b16 %v210, %v209
    %v222 = vpack.c.b16 %v212, %v211
    %v223 = vpack.c.b16 %v214, %v213
    %v224 = vpack.c.b16 %v216, %v215
    %233 = vmatpush.bf16.msra.mxu0 %v224
    %234 = vmatpush.bf16.msra.mxu0 %v223
    %235 = vmatpush.bf16.msra.mxu0 %v222
    %236 = vmatpush.bf16.msra.mxu0 %v221
    %237 = vmatpush.bf16.msra.mxu0 %v220
    %238 = vmatpush.bf16.msra.mxu0 %v219
    %239 = vmatpush.bf16.msra.mxu0 %v218
    %240 = vmatpush.bf16.msra.mxu0 %v217
    %241 = vmatmul.bf16.gmra.mxu0 %v183
    %v242 = vpop.f32.mrf.mxu0
    %v243 = vadd.f32 %v177, %v242
    %v244 = vpop.f32.mrf.mxu0
    %v245 = vadd.f32 %v177, %v244
    %246 = vdwg.mxu0
    %v247 = vmax.f32 %v243, 0.0
    %v248 = vmax.f32 %v245, 0.0
    %v249 = vld [vmem:[#allocation3] sm:$0xff]
    %v250 = vld [vmem:[#allocation3 + $0x8] sm:$0xff]
    %v251 = vpack.c.bf16 %v248, %v247
    %v252 = vld [vmem:[#allocation10] sm:$0xf]
    %v253 = vld [vmem:[#allocation10 + $0x4] sm:$0xf]
    %v254 = vld [vmem:[#allocation10 + $0x8] sm:$0xf]
    %v255 = vld [vmem:[#allocation10 + $0xc] sm:$0xf]
    %v256 = vld [vmem:[#allocation10 + $0x10] sm:$0xf]
    %v257 = vld [vmem:[#allocation10 + $0x14] sm:$0xf]
    %v258 = vld [vmem:[#allocation10 + $0x18] sm:$0xf]
    %v259 = vld [vmem:[#allocation10 + $0x1c] sm:$0xf]
    %v260 = vld [vmem:[#allocation10 + $0x20] sm:$0xf]
    %v261 = vld [vmem:[#allocation10 + $0x24] sm:$0xf]
    %v262 = vld [vmem:[#allocation10 + $0x28] sm:$0xf]
    %v263 = vld [vmem:[#allocation10 + $0x2c] sm:$0xf]
    %v264 = vld [vmem:[#allocation10 + $0x30] sm:$0xf]
    %v265 = vld [vmem:[#allocation10 + $0x34] sm:$0xf]
    %v266 = vld [vmem:[#allocation10 + $0x38] sm:$0xf]
    %v267 = vld [vmem:[#allocation10 + $0x3c] sm:$0xf]
    %v284 = vunpack.c.l.b16 %v252
    %v285 = vunpack.c.l.b16 %v253
    %v286 = vunpack.c.l.b16 %v254
    %v287 = vunpack.c.l.b16 %v255
    %v288 = vunpack.c.l.b16 %v256
    %v289 = vunpack.c.l.b16 %v257
    %v290 = vunpack.c.l.b16 %v258
    %v291 = vunpack.c.l.b16 %v259
    %v292 = vunpack.c.l.b16 %v260
    %v293 = vunpack.c.l.b16 %v261
    %v294 = vunpack.c.l.b16 %v262
    %v295 = vunpack.c.l.b16 %v263
    %v296 = vunpack.c.l.b16 %v264
    %v297 = vunpack.c.l.b16 %v265
    %v298 = vunpack.c.l.b16 %v266
    %v299 = vunpack.c.l.b16 %v267
    %v300 = vpack.c.b16 %v285, %v284
    %v301 = vpack.c.b16 %v287, %v286
    %v302 = vpack.c.b16 %v289, %v288
    %v303 = vpack.c.b16 %v291, %v290
    %v304 = vpack.c.b16 %v293, %v292
    %v305 = vpack.c.b16 %v295, %v294
    %v306 = vpack.c.b16 %v297, %v296
    %v307 = vpack.c.b16 %v299, %v298
    %316 = vmatpush.bf16.msra.mxu0 %v307
    %317 = vmatpush.bf16.msra.mxu0 %v306
    %318 = vmatpush.bf16.msra.mxu0 %v305
    %319 = vmatpush.bf16.msra.mxu0 %v304
    %320 = vmatpush.bf16.msra.mxu0 %v303
    %321 = vmatpush.bf16.msra.mxu0 %v302
    %322 = vmatpush.bf16.msra.mxu0 %v301
    %323 = vmatpush.bf16.msra.mxu0 %v300
    %324 = vmatmul.bf16.gmra.mxu0 %v251
    %v325 = vpop.f32.mrf.mxu0
    %v326 = vadd.f32 0.0, %v325
    %v327 = vpop.f32.mrf.mxu0
    %v328 = vadd.f32 0.0, %v327
    %329 = vdwg.mxu0
    %v330 = vadd.f32 %v249, %v326
    %v331 = vadd.f32 %v250, %v328
    %332 = vst [vmem:[#allocation3] sm:$0xff] %v330
    %333 = vst [vmem:[#allocation3 + $0x8] sm:$0xff] %v331
    // Predicated region
    $region50: #{tpu_custom_call.1} parent=1 // pred_check
      %p334 = pneg %p88
    $region51: #{tpu_custom_call.1} parent=1 // pred_check_branch
      %336 = sbr.rel (%p334) target = $region53
    $region52: #{tpu_custom_call.1} parent=1 // pred_region
      %v337 = vld [vmem:[#allocation3] sm:$0xff]
      %v338 = vld [vmem:[#allocation3 + $0x8] sm:$0xff]
      %v339 = vld [vmem:[%s6] sm:$0x1]
      %v341 = vperm.slane %v339, 0
      %v343 = vadd.f32 %v337, %v341
      %v344 = vadd.f32 %v338, %v341
      %345 = vst [vmem:[#allocation12] sm:$0xff] %v343
      %346 = vst [vmem:[#allocation12 + $0x8] sm:$0xff] %v344
    $region53: #{tpu_custom_call.1} parent=1 // pred_fallthru
      _
    // Predicated region
    $region54: #{tpu_custom_call.1} parent=1 // pred_check
      _
    $region55: #{tpu_custom_call.1} parent=1 // pred_check_branch
      %348 = sbr.rel (0) target = $region57
    $region56: #{tpu_custom_call.1} parent=1 // pred_region
      %350 = vsyncadd [#allocation6], 0
      %s351 = sshll.u32 [#allocation12], 4
      %s352 = int_to_ptr.vmem [resolvable:$true] %s351
      %s353 = sshll.u32 %s7, 4
      %s354 = int_to_ptr.hbm [resolvable:$true] %s353
      %359 = dma.vmem_to_hbm [thread:$0]  %s352, 256, %s354, [#allocation6], 128, 128, 8
    $region57: #{tpu_custom_call.1} parent=1 // pred_fallthru
      _
    // Predicated region
    $region58: #{tpu_custom_call.1} parent=1 // pred_check
      _
    $region59: #{tpu_custom_call.1} parent=1 // pred_check_branch
      %361 = sbr.rel (0) target = $region61
    $region60: #{tpu_custom_call.1} parent=1 // pred_region
      %363 = dma.done [#allocation6], 256
    $region61: #{tpu_custom_call.1} parent=1 // pred_fallthru
      _
    %364 = vsyncpa [#allocation5], 1
    %365 = vsyncpa [#allocation8], 1
    %366 = vsyncpa [#allocation11], 1
    %367 = vsyncpa [#allocation6], 1

</llo_original>
